<compile_context>
chip_gen: v6e
topology: v6e:2x2x1
jax: 0.10.0
libtpu: 0.0.40
codegen_flags: <defaults>
</compile_context>

<pallas_src>
import jax
import jax.numpy as jnp
import numpy as np
from jax import lax
from jax.experimental import pallas as pl
from jax.experimental.pallas import tpu as pltpu

NUM_GROUPS = 16
EPS = 1e-5  # torch.nn.GroupNorm default eps


def _round_up(x, m):
    return ((x + m - 1) // m) * m


# ---------------------------------------------------------------------------
# Pallas kernel: one (batch, N-tile) step.
# All GroupNorm math is already folded into the per-batch scaled weights.
# ---------------------------------------------------------------------------
def _feature_kernel(uvxyz_ref, img_ref, bf_ref, bb_ref,
                    w_head_ref, b_head_ref,
                    w_img_ref, b_img_ref,
                    w_bf_ref, b_bf_ref,
                    w_bb_ref, b_bb_ref,
                    out_ref):
    F = w_img_ref.shape[-1]  # static

    # Fused uv/xyz embed: (TN, 6) @ (6, 2F)  -> columns [0, 2F)
    head = jnp.dot(uvxyz_ref[0], w_head_ref[...],
                   preferred_element_type=jnp.float32) + b_head_ref[...]

    # Plain channels-last projections; GroupNorm folded into w_*/b_* already.
    img = jnp.dot(img_ref[0], w_img_ref[0],
                  preferred_element_type=jnp.float32) + b_img_ref[0]
    bf = jnp.dot(bf_ref[0], w_bf_ref[0],
                 preferred_element_type=jnp.float32) + b_bf_ref[0]
    bb = jnp.dot(bb_ref[0], w_bb_ref[0],
                 preferred_element_type=jnp.float32) + b_bb_ref[0]

    # Direct slice stores (no concatenate copy).
    out_ref[0, :, 0:2 * F] = head.astype(out_ref.dtype)
    out_ref[0, :, 2 * F:3 * F] = (img + bf).astype(out_ref.dtype)
    out_ref[0, :, 3 * F:4 * F] = (img + bb).astype(out_ref.dtype)


# ---------------------------------------------------------------------------
# JAX glue: bilinear grid_sample (align_corners=False, padding_mode='zeros')
# producing channels-LAST samples.
# ---------------------------------------------------------------------------
def grid_sample_bilinear(feat, grid):
    """feat: (B, C, H, W) NCHW, grid: (B, N, 2) in [-1, 1] -> (B, N, C)."""
    B, C, H, W = feat.shape
    gx = grid[..., 0]
    gy = grid[..., 1]
    x = ((gx + 1.0) * W - 1.0) * 0.5
    y = ((gy + 1.0) * H - 1.0) * 0.5
    x0 = jnp.floor(x)
    x1 = x0 + 1.0
    y0 = jnp.floor(y)
    y1 = y0 + 1.0
    wx1 = x - x0
    wx0 = 1.0 - wx1
    wy1 = y - y0
    wy0 = 1.0 - wy1

    # Channels-last flat view: each gathered point reads C contiguous values.
    flat = jnp.transpose(feat, (0, 2, 3, 1)).reshape(B, H * W, C)

    def gather(ix, iy):
        valid = (ix >= 0) & (ix <= W - 1) & (iy >= 0) & (iy <= H - 1)
        ixc = jnp.clip(ix, 0, W - 1).astype(jnp.int32)
        iyc = jnp.clip(iy, 0, H - 1).astype(jnp.int32)
        idx = iyc * W + ixc                                     # (B, N)
        g = jnp.take_along_axis(flat, idx[:, :, None], axis=1)  # (B, N, C)
        return g * valid[:, :, None].astype(feat.dtype)

    return (gather(x0, y0) * (wx0 * wy0)[..., None]
            + gather(x1, y0) * (wx1 * wy0)[..., None]
            + gather(x0, y1) * (wx0 * wy1)[..., None]
            + gather(x1, y1) * (wx1 * wy1)[..., None])


def extract_image_features(points_2D, features):
    lookups = [grid_sample_bilinear(f, points_2D) for f in features]
    return jnp.concatenate(lookups, axis=-1)  # (B, N, C_sum) channels-last


# ---------------------------------------------------------------------------
# GroupNorm stats (two-pass variance to avoid E[x^2]-E[x]^2 cancellation),
# computed per batch on the channels-last sampled tensor.
# ---------------------------------------------------------------------------
def _group_stats(x):  # x: (B, N, C)
    B, N, C = x.shape
    gs = C // NUM_GROUPS
    xg = x.reshape(B, N, NUM_GROUPS, gs)
    mean_g = jnp.mean(xg, axis=(1, 3))                                      # (B, G)
    var_g = jnp.mean(jnp.square(xg - mean_g[:, None, :, None]), axis=(1, 3))  # (B, G)
    m_c = jnp.repeat(mean_g, gs, axis=1)                   # (B, C)
    s_c = lax.rsqrt(jnp.repeat(var_g, gs, axis=1) + EPS)   # (B, C)
    return m_c, s_c


def _fold_groupnorm(x_raw, w, bias):
    """Return per-batch scaled weight (B,C,F) and adjusted bias (B,1,F)."""
    m_c, s_c = _group_stats(x_raw)
    w_s = w[None, :, :] * s_c[:, :, None]
    b_s = bias[None, :, :] - jnp.einsum('bc,cf->bf', m_c * s_c, w)[:, None, :]
    return w_s, b_s


# ---------------------------------------------------------------------------
# Wrapper: gather + stat folding + tiled Pallas launch.
# ---------------------------------------------------------------------------
def feature_network_forward(points_uv, points_3D, points_2D,
                            features, featuresBody_f, featuresBody_b, params,
                            tile_n=512):
    img_raw = extract_image_features(points_2D, features)        # (B, N, C_sum)
    bf_raw = extract_image_features(points_2D, featuresBody_f)
    bb_raw = extract_image_features(points_2D, featuresBody_b)

    B, N, C_sum = img_raw.shape
    F = params["w_img"].shape[1]

    # Fold GroupNorm into per-batch scaled weights / biases (tiny arrays).
    w_img_s, b_img_s = _fold_groupnorm(img_raw, params["w_img"], params["b_img"])
    w_bf_s, b_bf_s = _fold_groupnorm(bf_raw, params["w_body"], params["b_body"])
    w_bb_s, b_bb_s = _fold_groupnorm(bb_raw, params["w_body"], params["b_body"])

    # Fused uv/xyz embed: block-diagonal (6, 2F) weight, (1, 2F) bias.
    zeros3F = jnp.zeros((3, F), jnp.float32)
    w_head = jnp.concatenate(
        [jnp.concatenate([params["w_uv"], zeros3F], axis=1),
         jnp.concatenate([zeros3F, params["w_xyz"]], axis=1)], axis=0)  # (6, 2F)
    b_head = jnp.concatenate([params["b_uv"], params["b_xyz"]], axis=1)  # (1, 2F)
    uvxyz = jnp.concatenate([points_uv, points_3D], axis=-1)             # (B, N, 6)

    # Tile N (sublane-aligned); pad to a multiple of the tile size.
    TN = int(tile_n)
    N_pad = max(_round_up(N, 8), 8)
    if N_pad > TN:
        N_pad = _round_up(N, TN)
    else:
        TN = N_pad

    def pad_n(x):
        if x.shape[1] == N_pad:
            return x
        return jnp.pad(x, ((0, 0), (0, N_pad - x.shape[1]), (0, 0)))

    uvxyz_p = pad_n(uvxyz)
    img_p = pad_n(img_raw)
    bf_p = pad_n(bf_raw)
    bb_p = pad_n(bb_raw)

    n_tiles = N_pad // TN

    tileN = lambda c: pl.BlockSpec((1, TN, c), lambda b, n: (b, n, 0))
    perB = lambda s0, s1: pl.BlockSpec((1, s0, s1), lambda b, n: (b, 0, 0))
    shared = lambda s0, s1: pl.BlockSpec((s0, s1), lambda b, n: (0, 0))

    out = pl.pallas_call(
        _feature_kernel,
        out_shape=jax.ShapeDtypeStruct((B, N_pad, 4 * F), jnp.float32),
        grid=(B, n_tiles),
        in_specs=[
            tileN(6),                    # uvxyz tile
            tileN(C_sum),                # img samples tile
            tileN(C_sum),                # body_f samples tile
            tileN(C_sum),                # body_b samples tile
            shared(6, 2 * F),            # fused uv/xyz weight
            shared(1, 2 * F),            # fused uv/xyz bias
            perB(C_sum, F), perB(1, F),  # img proj (GN folded, per batch)
            perB(C_sum, F), perB(1, F),  # body proj for bf (GN folded)
            perB(C_sum, F), perB(1, F),  # body proj for bb (GN folded)
        ],
        out_specs=pl.BlockSpec((1, TN, 4 * F), lambda b, n: (b, n, 0)),
        compiler_params=pltpu.CompilerParams(
            dimension_semantics=("parallel", "parallel"),
            vmem_limit_bytes=64 * 1024 * 1024),
    )(uvxyz_p, img_p, bf_p, bb_p,
      w_head, b_head,
      w_img_s, b_img_s, w_bf_s, b_bf_s, w_bb_s, b_bb_s)

    return out[:, :N, :]


# ---------------------------------------------------------------------------
# Pure-JAX reference (mirrors the PyTorch forward) for verification
# ---------------------------------------------------------------------------
def reference_forward(points_uv, points_3D, points_2D,
                      features, featuresBody_f, featuresBody_b, params):
    def group_norm_cl(x):  # x: (B, N, C) channels-last; mimic torch GroupNorm on (B, C, N)
        B, N, C = x.shape
        xt = x.transpose(0, 2, 1)                                   # (B, C, N)
        xg = xt.reshape(B, NUM_GROUPS, (C // NUM_GROUPS) * N)
        m = xg.mean(axis=2, keepdims=True)
        v = xg.var(axis=2, keepdims=True)
        xn = ((xg - m) / jnp.sqrt(v + EPS)).reshape(B, C, N)
        return xn.transpose(0, 2, 1)

    lin = lambda x, w, b: x @ w + b
    uv_f = lin(points_uv, params["w_uv"], params["b_uv"])
    xyz_f = lin(points_3D, params["w_xyz"], params["b_xyz"])
    img_n = group_norm_cl(extract_image_features(points_2D, features))
    img_f = lin(img_n, params["w_img"], params["b_img"])
    bf_n = group_norm_cl(extract_image_features(points_2D, featuresBody_f))
    bb_n = group_norm_cl(extract_image_features(points_2D, featuresBody_b))
    bf_f = lin(bf_n, params["w_body"], params["b_body"])
    bb_f = lin(bb_n, params["w_body"], params["b_body"])
    return jnp.concatenate([uv_f, xyz_f, img_f + bf_f, img_f + bb_f], axis=-1)


if __name__ == "__main__":
    key = jax.random.PRNGKey(0)
    B, N = 2, 8
    F = 64                            # small feature_dim (module default 3*128)
    context_dims = (16, 32, 80)       # small stand-in for (96, 192, 384); sum=128, 16 groups of 8
    spatial = (16, 8, 4)
    C_sum = sum(context_dims)

    keys = jax.random.split(key, 20)
    params = {
        "w_uv":   jax.random.normal(keys[0], (3, F), jnp.float32) * 0.3,
        "b_uv":   jax.random.normal(keys[1], (1, F), jnp.float32) * 0.1,
        "w_xyz":  jax.random.normal(keys[2], (3, F), jnp.float32) * 0.3,
        "b_xyz":  jax.random.normal(keys[3], (1, F), jnp.float32) * 0.1,
        "w_img":  jax.random.normal(keys[4], (C_sum, F), jnp.float32) / jnp.sqrt(C_sum),
        "b_img":  jax.random.normal(keys[5], (1, F), jnp.float32) * 0.1,
        "w_body": jax.random.normal(keys[6], (C_sum, F), jnp.float32) / jnp.sqrt(C_sum),
        "b_body": jax.random.normal(keys[7], (1, F), jnp.float32) * 0.1,
    }
    points_uv = jax.random.normal(keys[8], (B, N, 3), jnp.float32)
    points_3D = jax.random.normal(keys[9], (B, N, 3), jnp.float32)
    points_2D = jax.random.uniform(keys[10], (B, N, 2), jnp.float32, -1.0, 1.0)
    features = [jax.random.normal(keys[11 + i], (B, c, s, s), jnp.float32)
                for i, (c, s) in enumerate(zip(context_dims, spatial))]
    featuresBody_f = [jax.random.normal(keys[14 + i], (B, c, s, s), jnp.float32)
                      for i, (c, s) in enumerate(zip(context_dims, spatial))]
    featuresBody_b = [jax.random.normal(keys[17 + i], (B, c, s, s), jnp.float32)
                      for i, (c, s) in enumerate(zip(context_dims, spatial))]

    out = feature_network_forward(points_uv, points_3D, points_2D,
                                  features, featuresBody_f, featuresBody_b, params)
    out = jax.block_until_ready(out)
    assert out.shape == (B, N, 4 * F), out.shape

    ref = reference_forward(points_uv, points_3D, points_2D,
                            features, featuresBody_f, featuresBody_b, params)
    np.testing.assert_allclose(np.asarray(out), np.asarray(ref), atol=2e-4, rtol=2e-4)
    print("KERNEL_OK")
</pallas_src>

<mosaic_0001>
module attributes {stable_mosaic.version = 11 : i64} {
  func.func @_feature_kernel(%arg0: i32, %arg1: i32, %arg2: memref<1x8x6xf32, #tpu.memory_space<vmem>>, %arg3: memref<1x8x128xf32, #tpu.memory_space<vmem>>, %arg4: memref<1x8x128xf32, #tpu.memory_space<vmem>>, %arg5: memref<1x8x128xf32, #tpu.memory_space<vmem>>, %arg6: memref<6x128xf32, #tpu.memory_space<vmem>>, %arg7: memref<1x128xf32, #tpu.memory_space<vmem>>, %arg8: memref<1x128x64xf32, #tpu.memory_space<vmem>>, %arg9: memref<1x1x64xf32, #tpu.memory_space<vmem>>, %arg10: memref<1x128x64xf32, #tpu.memory_space<vmem>>, %arg11: memref<1x1x64xf32, #tpu.memory_space<vmem>>, %arg12: memref<1x128x64xf32, #tpu.memory_space<vmem>>, %arg13: memref<1x1x64xf32, #tpu.memory_space<vmem>>, %arg14: memref<1x8x256xf32, #tpu.memory_space<vmem>>) attributes {dimension_semantics = [#tpu.dimension_semantics<parallel>, #tpu.dimension_semantics<parallel>], iteration_bounds = array<i64: 2, 1>, scalar_prefetch = 0 : i64, scratch_operands = 0 : i64, tpu.core_type = #tpu.core_type<tc>, window_params = [{transform_indices = @transform_0, window_bounds = array<i64: 1, 8, 6>}, {transform_indices = @transform_1, window_bounds = array<i64: 1, 8, 128>}, {transform_indices = @transform_2, window_bounds = array<i64: 1, 8, 128>}, {transform_indices = @transform_3, window_bounds = array<i64: 1, 8, 128>}, {pipeline_mode = #tpu.pipeline_mode<synchronous>, transform_indices = @transform_4, window_bounds = array<i64: 6, 128>}, {pipeline_mode = #tpu.pipeline_mode<synchronous>, transform_indices = @transform_5, window_bounds = array<i64: 1, 128>}, {transform_indices = @transform_6, window_bounds = array<i64: 1, 128, 64>}, {transform_indices = @transform_7, window_bounds = array<i64: 1, 1, 64>}, {transform_indices = @transform_8, window_bounds = array<i64: 1, 128, 64>}, {transform_indices = @transform_9, window_bounds = array<i64: 1, 1, 64>}, {transform_indices = @transform_10, window_bounds = array<i64: 1, 128, 64>}, {transform_indices = @transform_11, window_bounds = array<i64: 1, 1, 64>}, {transform_indices = @transform_12, window_bounds = array<i64: 1, 8, 256>}]} {
    %c0 = arith.constant 0 : index
    %c0_0 = arith.constant 0 : index
    %c0_1 = arith.constant 0 : index
    %0 = vector.load %arg2[%c0, %c0_0, %c0_1] : memref<1x8x6xf32, #tpu.memory_space<vmem>>, vector<1x8x6xf32>
    %1 = vector.shape_cast %0 : vector<1x8x6xf32> to vector<8x6xf32>
    %c0_2 = arith.constant 0 : index
    %c0_3 = arith.constant 0 : index
    %2 = vector.load %arg6[%c0_2, %c0_3] : memref<6x128xf32, #tpu.memory_space<vmem>>, vector<6x128xf32>
    %cst = arith.constant dense<0.000000e+00> : vector<8x128xf32>
    %3 = tpu.matmul %1, %2, %cst {dimension_numbers = #tpu.dot_dimension_numbers<[1], [0], [0], [1], [0, 0, 1, 1], [], []>} : vector<8x6xf32>, vector<6x128xf32>, vector<8x128xf32> -> vector<8x128xf32>
    %c0_4 = arith.constant 0 : index
    %c0_5 = arith.constant 0 : index
    %4 = vector.load %arg7[%c0_4, %c0_5] : memref<1x128xf32, #tpu.memory_space<vmem>>, vector<1x128xf32>
    %5 = vector.broadcast %4 : vector<1x128xf32> to vector<8x128xf32>
    %6 = arith.addf %3, %5 : vector<8x128xf32>
    %c0_6 = arith.constant 0 : index
    %c0_7 = arith.constant 0 : index
    %c0_8 = arith.constant 0 : index
    %7 = vector.load %arg3[%c0_6, %c0_7, %c0_8] : memref<1x8x128xf32, #tpu.memory_space<vmem>>, vector<1x8x128xf32>
    %8 = vector.shape_cast %7 : vector<1x8x128xf32> to vector<8x128xf32>
    %c0_9 = arith.constant 0 : index
    %c0_10 = arith.constant 0 : index
    %c0_11 = arith.constant 0 : index
    %9 = vector.load %arg8[%c0_9, %c0_10, %c0_11] : memref<1x128x64xf32, #tpu.memory_space<vmem>>, vector<1x128x64xf32>
    %10 = vector.shape_cast %9 : vector<1x128x64xf32> to vector<128x64xf32>
    %cst_12 = arith.constant dense<0.000000e+00> : vector<8x64xf32>
    %11 = tpu.matmul %8, %10, %cst_12 {dimension_numbers = #tpu.dot_dimension_numbers<[1], [0], [0], [1], [0, 0, 1, 1], [], []>} : vector<8x128xf32>, vector<128x64xf32>, vector<8x64xf32> -> vector<8x64xf32>
    %c0_13 = arith.constant 0 : index
    %c0_14 = arith.constant 0 : index
    %c0_15 = arith.constant 0 : index
    %12 = vector.load %arg9[%c0_13, %c0_14, %c0_15] : memref<1x1x64xf32, #tpu.memory_space<vmem>>, vector<1x1x64xf32>
    %13 = vector.shape_cast %12 : vector<1x1x64xf32> to vector<1x64xf32>
    %14 = vector.broadcast %13 : vector<1x64xf32> to vector<8x64xf32>
    %15 = arith.addf %11, %14 : vector<8x64xf32>
    %c0_16 = arith.constant 0 : index
    %c0_17 = arith.constant 0 : index
    %c0_18 = arith.constant 0 : index
    %16 = vector.load %arg4[%c0_16, %c0_17, %c0_18] : memref<1x8x128xf32, #tpu.memory_space<vmem>>, vector<1x8x128xf32>
    %17 = vector.shape_cast %16 : vector<1x8x128xf32> to vector<8x128xf32>
    %c0_19 = arith.constant 0 : index
    %c0_20 = arith.constant 0 : index
    %c0_21 = arith.constant 0 : index
    %18 = vector.load %arg10[%c0_19, %c0_20, %c0_21] : memref<1x128x64xf32, #tpu.memory_space<vmem>>, vector<1x128x64xf32>
    %19 = vector.shape_cast %18 : vector<1x128x64xf32> to vector<128x64xf32>
    %cst_22 = arith.constant dense<0.000000e+00> : vector<8x64xf32>
    %20 = tpu.matmul %17, %19, %cst_22 {dimension_numbers = #tpu.dot_dimension_numbers<[1], [0], [0], [1], [0, 0, 1, 1], [], []>} : vector<8x128xf32>, vector<128x64xf32>, vector<8x64xf32> -> vector<8x64xf32>
    %c0_23 = arith.constant 0 : index
    %c0_24 = arith.constant 0 : index
    %c0_25 = arith.constant 0 : index
    %21 = vector.load %arg11[%c0_23, %c0_24, %c0_25] : memref<1x1x64xf32, #tpu.memory_space<vmem>>, vector<1x1x64xf32>
    %22 = vector.shape_cast %21 : vector<1x1x64xf32> to vector<1x64xf32>
    %23 = vector.broadcast %22 : vector<1x64xf32> to vector<8x64xf32>
    %24 = arith.addf %20, %23 : vector<8x64xf32>
    %c0_26 = arith.constant 0 : index
    %c0_27 = arith.constant 0 : index
    %c0_28 = arith.constant 0 : index
    %25 = vector.load %arg5[%c0_26, %c0_27, %c0_28] : memref<1x8x128xf32, #tpu.memory_space<vmem>>, vector<1x8x128xf32>
    %26 = vector.shape_cast %25 : vector<1x8x128xf32> to vector<8x128xf32>
    %c0_29 = arith.constant 0 : index
    %c0_30 = arith.constant 0 : index
    %c0_31 = arith.constant 0 : index
    %27 = vector.load %arg12[%c0_29, %c0_30, %c0_31] : memref<1x128x64xf32, #tpu.memory_space<vmem>>, vector<1x128x64xf32>
    %28 = vector.shape_cast %27 : vector<1x128x64xf32> to vector<128x64xf32>
    %cst_32 = arith.constant dense<0.000000e+00> : vector<8x64xf32>
    %29 = tpu.matmul %26, %28, %cst_32 {dimension_numbers = #tpu.dot_dimension_numbers<[1], [0], [0], [1], [0, 0, 1, 1], [], []>} : vector<8x128xf32>, vector<128x64xf32>, vector<8x64xf32> -> vector<8x64xf32>
    %c0_33 = arith.constant 0 : index
    %c0_34 = arith.constant 0 : index
    %c0_35 = arith.constant 0 : index
    %30 = vector.load %arg13[%c0_33, %c0_34, %c0_35] : memref<1x1x64xf32, #tpu.memory_space<vmem>>, vector<1x1x64xf32>
    %31 = vector.shape_cast %30 : vector<1x1x64xf32> to vector<1x64xf32>
    %32 = vector.broadcast %31 : vector<1x64xf32> to vector<8x64xf32>
    %33 = arith.addf %29, %32 : vector<8x64xf32>
    %c0_36 = arith.constant 0 : index
    %c0_37 = arith.constant 0 : index
    %c0_38 = arith.constant 0 : index
    %34 = vector.load %arg14[%c0_36, %c0_37, %c0_38] : memref<1x8x256xf32, #tpu.memory_space<vmem>>, vector<1x8x128xf32>
    %35 = vector.shape_cast %34 : vector<1x8x128xf32> to vector<8x128xf32>
    %36 = vector.shape_cast %6 : vector<8x128xf32> to vector<1x8x128xf32>
    tpu.vector_store %arg14[%c0_36, %c0_37, %c0_38], %36 {strides = array<i32>} : memref<1x8x256xf32, #tpu.memory_space<vmem>>, vector<1x8x128xf32>,
    %37 = arith.addf %15, %24 : vector<8x64xf32>
    %c0_39 = arith.constant 0 : index
    %c0_40 = arith.constant 0 : index
    %c128 = arith.constant 128 : index
    %38 = vector.load %arg14[%c0_39, %c0_40, %c128] : memref<1x8x256xf32, #tpu.memory_space<vmem>>, vector<1x8x64xf32>
    %39 = vector.shape_cast %38 : vector<1x8x64xf32> to vector<8x64xf32>
    %40 = vector.shape_cast %37 : vector<8x64xf32> to vector<1x8x64xf32>
    tpu.vector_store %arg14[%c0_39, %c0_40, %c128], %40 {strides = array<i32>} : memref<1x8x256xf32, #tpu.memory_space<vmem>>, vector<1x8x64xf32>,
    %41 = arith.addf %15, %33 : vector<8x64xf32>
    %c0_41 = arith.constant 0 : index
    %c0_42 = arith.constant 0 : index
    %c192 = arith.constant 192 : index
    %42 = vector.load %arg14[%c0_41, %c0_42, %c192] : memref<1x8x256xf32, #tpu.memory_space<vmem>>, vector<1x8x64xf32>
    %43 = vector.shape_cast %42 : vector<1x8x64xf32> to vector<8x64xf32>
    %44 = vector.shape_cast %41 : vector<8x64xf32> to vector<1x8x64xf32>
    tpu.vector_store %arg14[%c0_41, %c0_42, %c192], %44 {strides = array<i32>} : memref<1x8x256xf32, #tpu.memory_space<vmem>>, vector<1x8x64xf32>,
    return
  }
  func.func @transform_0(%arg0: i32, %arg1: i32) -> (i32, i32, i32) {
    %c0_i32 = arith.constant 0 : i32
    %c0_i32_0 = arith.constant 0 : i32
    return %arg0, %arg1, %c0_i32 : i32, i32, i32
  }
  func.func @transform_1(%arg0: i32, %arg1: i32) -> (i32, i32, i32) {
    %c0_i32 = arith.constant 0 : i32
    %c0_i32_0 = arith.constant 0 : i32
    return %arg0, %arg1, %c0_i32 : i32, i32, i32
  }
  func.func @transform_2(%arg0: i32, %arg1: i32) -> (i32, i32, i32) {
    %c0_i32 = arith.constant 0 : i32
    %c0_i32_0 = arith.constant 0 : i32
    return %arg0, %arg1, %c0_i32 : i32, i32, i32
  }
  func.func @transform_3(%arg0: i32, %arg1: i32) -> (i32, i32, i32) {
    %c0_i32 = arith.constant 0 : i32
    %c0_i32_0 = arith.constant 0 : i32
    return %arg0, %arg1, %c0_i32 : i32, i32, i32
  }
  func.func @transform_4(%arg0: i32, %arg1: i32) -> (i32, i32) {
    %c0_i32 = arith.constant 0 : i32
    %c0_i32_0 = arith.constant 0 : i32
    %c0_i32_1 = arith.constant 0 : i32
    return %c0_i32, %c0_i32_0 : i32, i32
  }
  func.func @transform_5(%arg0: i32, %arg1: i32) -> (i32, i32) {
    %c0_i32 = arith.constant 0 : i32
    %c0_i32_0 = arith.constant 0 : i32
    %c0_i32_1 = arith.constant 0 : i32
    return %c0_i32, %c0_i32_0 : i32, i32
  }
  func.func @transform_6(%arg0: i32, %arg1: i32) -> (i32, i32, i32) {
    %c0_i32 = arith.constant 0 : i32
    %c0_i32_0 = arith.constant 0 : i32
    %c0_i32_1 = arith.constant 0 : i32
    return %arg0, %c0_i32, %c0_i32_0 : i32, i32, i32
  }
  func.func @transform_7(%arg0: i32, %arg1: i32) -> (i32, i32, i32) {
    %c0_i32 = arith.constant 0 : i32
    %c0_i32_0 = arith.constant 0 : i32
    %c0_i32_1 = arith.constant 0 : i32
    return %arg0, %c0_i32, %c0_i32_0 : i32, i32, i32
  }
  func.func @transform_8(%arg0: i32, %arg1: i32) -> (i32, i32, i32) {
    %c0_i32 = arith.constant 0 : i32
    %c0_i32_0 = arith.constant 0 : i32
    %c0_i32_1 = arith.constant 0 : i32
    return %arg0, %c0_i32, %c0_i32_0 : i32, i32, i32
  }
  func.func @transform_9(%arg0: i32, %arg1: i32) -> (i32, i32, i32) {
    %c0_i32 = arith.constant 0 : i32
    %c0_i32_0 = arith.constant 0 : i32
    %c0_i32_1 = arith.constant 0 : i32
    return %arg0, %c0_i32, %c0_i32_0 : i32, i32, i32
  }
  func.func @transform_10(%arg0: i32, %arg1: i32) -> (i32, i32, i32) {
    %c0_i32 = arith.constant 0 : i32
    %c0_i32_0 = arith.constant 0 : i32
    %c0_i32_1 = arith.constant 0 : i32
    return %arg0, %c0_i32, %c0_i32_0 : i32, i32, i32
  }
  func.func @transform_11(%arg0: i32, %arg1: i32) -> (i32, i32, i32) {
    %c0_i32 = arith.constant 0 : i32
    %c0_i32_0 = arith.constant 0 : i32
    %c0_i32_1 = arith.constant 0 : i32
    return %arg0, %c0_i32, %c0_i32_0 : i32, i32, i32
  }
  func.func @transform_12(%arg0: i32, %arg1: i32) -> (i32, i32, i32) {
    %c0_i32 = arith.constant 0 : i32
    %c0_i32_0 = arith.constant 0 : i32
    return %arg0, %arg1, %c0_i32 : i32, i32, i32
  }
}

</mosaic_0001>

<llo_original>
// kernel: tpu_custom_call.1
$region0: #{tpu_custom_call.1}
  #allocation0 [shape = 'u32[]', space=smem, size = 0x4, offset = 0x4, fixed_abs, tag = 'smem constant byte address 0x4 - core index']
  #allocation1 [shape = 'u32[144,128]{1,0:T(1,128)}', space=vmem, size = 0x12000, scoped, tag = 'internal scratch']
  %s0 = inlined_call_operand.vmem [shape: f32[2,8,6], index: 0, kind: input, shape index: {}]
  %s1 = inlined_call_operand.vmem [shape: f32[2,8,128], index: 1, kind: input, shape index: {}]
  %s2 = inlined_call_operand.vmem [shape: f32[2,8,128], index: 2, kind: input, shape index: {}]
  %s3 = inlined_call_operand.vmem [shape: f32[2,8,128], index: 3, kind: input, shape index: {}]
  %s4 = inlined_call_operand.vmem [shape: f32[6,128], index: 4, kind: input, shape index: {}]
  %s5 = inlined_call_operand.vmem [shape: f32[1,128], index: 5, kind: input, shape index: {}]
  %s6 = inlined_call_operand.vmem [shape: f32[2,128,64], index: 6, kind: input, shape index: {}]
  %s7 = inlined_call_operand.vmem [shape: f32[2,1,64], index: 7, kind: input, shape index: {}]
  %s8 = inlined_call_operand.vmem [shape: f32[2,128,64], index: 8, kind: input, shape index: {}]
  %s9 = inlined_call_operand.vmem [shape: f32[2,1,64], index: 9, kind: input, shape index: {}]
  %s10 = inlined_call_operand.vmem [shape: f32[2,128,64], index: 10, kind: input, shape index: {}]
  %s11 = inlined_call_operand.vmem [shape: f32[2,1,64], index: 11, kind: input, shape index: {}]
  %s12 = inlined_call_operand.hbm [shape: f32[2,8,256], index: 12, kind: output, shape index: {}]
  %s13 = sld [smem:[#allocation0]]
  $region81: #{tpu_custom_call.1} parent=0
    _
  %s15 = ssub.s32 1, %s13
  %s16 = scalar_select 0, %s15, %s13
  $region1: #{tpu_custom_call.1} parent=0
    #allocation2 [shape = 'u8[16384]{0}', space=vmem, size = 0x4000, scoped, tag = 'output window, operand 0']
    #allocation3 [shape = 's32[2]{0}', space=sflag, size = 0x8, scoped, tag = 'scoped memory for tpu_custom_call.1']
    %17 = vsyncpa [#allocation3], 0
    %s18 = scalar_lea.sflag [#allocation3], 1
    %19 = vsyncpa %s18, 0
    loop: start=0, step=1, limit=4
    $region2: #{tpu_custom_call.1} parent=1 // loop_pre_header
      _
    $region3: #{tpu_custom_call.1} parent=1 // loop_header
      %s21 = sphi 0, %s25
      %p22 = scmp.ge.s32.totalorder %s21, 4
      %s28 = sphi 0, %s40
      %s29 = sphi 0, %s36
      %s30 = sphi 0, %s28
      %s31 = sphi 0, %s29
      %s32 = sphi 0, %s30
      %s33 = sphi 0, %s31
      %s45 = sphi 0, %s47
      %s48 = sphi 0, %s45
      %s49 = sphi 0, %s48
      %s65 = sphi 0, %s49
      %s73 = sphi 0, %s75
      %s76 = sphi 0, %s73
      %s77 = sphi 0, %s76
      %s93 = sphi 0, %s77
      %s101 = sphi 0, %s103
      %s104 = sphi 0, %s101
      %s105 = sphi 0, %s104
      %s121 = sphi 0, %s105
      %s129 = sphi 0, %s131
      %s132 = sphi 0, %s129
      %s133 = sphi 0, %s132
      %s149 = sphi 0, %s133
      %s153 = sphi 0, %s153
      %s155 = sphi 0, %s153
      %s156 = sphi 0, %s155
      %s170 = sphi 0, %s156
      %s174 = sphi 0, %s174
      %s176 = sphi 0, %s174
      %s177 = sphi 0, %s176
      %s191 = sphi 0, %s177
      %s197 = sphi 0, %s199
      %s200 = sphi 0, %s197
      %s201 = sphi 0, %s200
      %s217 = sphi 0, %s201
      %s223 = sphi 0, %s225
      %s226 = sphi 0, %s223
      %s227 = sphi 0, %s226
      %s243 = sphi 0, %s227
      %s249 = sphi 0, %s251
      %s252 = sphi 0, %s249
      %s253 = sphi 0, %s252
      %s269 = sphi 0, %s253
      %s275 = sphi 0, %s277
      %s278 = sphi 0, %s275
      %s279 = sphi 0, %s278
      %s295 = sphi 0, %s279
      %s301 = sphi 0, %s303
      %s304 = sphi 0, %s301
      %s305 = sphi 0, %s304
      %s321 = sphi 0, %s305
      %s327 = sphi 0, %s329
      %s330 = sphi 0, %s327
      %s331 = sphi 0, %s330
      %s347 = sphi 0, %s331
      %s355 = sphi 0, %s357
      %s358 = sphi 0, %s355
      %s359 = sphi 0, %s358
      %s375 = sphi 0, %s359
    $region4: #{tpu_custom_call.1} parent=1 // loop_header_branch
      %24 = sbr.rel (%p22) target = $region8
    $region5: #{tpu_custom_call.1} parent=1 // loop_body
      %s26 = ssub.s32 %s21, 1
      %s27 = ssub.s32 %s21, 2
      %s34 = sadd.s32 1, %s29
      %p35 = scmp.ge.s32.totalorder %s34, 1
      %s36 = scalar_select %p35, 0, %s34
      %s37 = sadd.s32 1, %s28
      %s38 = scalar_select %p35, %s37, %s28
      %p39 = scmp.ge.s32.totalorder %s38, 2
      %s40 = scalar_select %p39, 0, %s38
      %s41 = ssub.s32 %s28, %s40
      %s42 = ssub.s32 %s29, %s36
      %s43 = sor.u32 %s41, %s42
      %p44 = scmp.eq.s32.totalorder %s43, 0
      %s46 = sadd.s32 %s45, 1
      %s47 = scalar_select %p44, %s45, %s46
      %p50 = pneg %p44
      %p51 = scmp.eq.s32.totalorder %s21, 1
      %p52 = por %p50, %p51
      %p53 = scmp.ne.s32.totalorder %s45, %s48
      %p54 = scmp.eq.s32.totalorder %s21, 0
      %p55 = por %p53, %p54
      %p56 = scmp.ne.s32.totalorder %s45, %s48
      %p57 = scmp.eq.s32.totalorder %s26, 1
      %p58 = por %p56, %p57
      %p59 = scmp.ne.s32.totalorder %s48, %s49
      %p60 = scmp.eq.s32.totalorder %s26, 0
      %p61 = por %p59, %p60
      %p62 = scmp.ne.s32.totalorder %s48, %s49
      %p63 = scmp.eq.s32.totalorder %s27, 1
      %p64 = por %p62, %p63
      %p66 = scmp.ne.s32.totalorder %s49, %s65
      %p67 = scmp.eq.s32.totalorder %s27, 0
      %p68 = por %p66, %p67
      %s69 = ssub.s32 %s28, %s40
      %s70 = ssub.s32 %s29, %s36
      %s71 = sor.u32 %s69, %s70
      %p72 = scmp.eq.s32.totalorder %s71, 0
      %s74 = sadd.s32 %s73, 1
      %s75 = scalar_select %p72, %s73, %s74
      %p78 = pneg %p72
      %p79 = scmp.eq.s32.totalorder %s21, 1
      %p80 = por %p78, %p79
      %p81 = scmp.ne.s32.totalorder %s73, %s76
      %p82 = scmp.eq.s32.totalorder %s21, 0
      %p83 = por %p81, %p82
      %p84 = scmp.ne.s32.totalorder %s73, %s76
      %p85 = scmp.eq.s32.totalorder %s26, 1
      %p86 = por %p84, %p85
      %p87 = scmp.ne.s32.totalorder %s76, %s77
      %p88 = scmp.eq.s32.totalorder %s26, 0
      %p89 = por %p87, %p88
      %p90 = scmp.ne.s32.totalorder %s76, %s77
      %p91 = scmp.eq.s32.totalorder %s27, 1
      %p92 = por %p90, %p91
      %p94 = scmp.ne.s32.totalorder %s77, %s93
      %p95 = scmp.eq.s32.totalorder %s27, 0
      %p96 = por %p94, %p95
      %s97 = ssub.s32 %s28, %s40
      %s98 = ssub.s32 %s29, %s36
      %s99 = sor.u32 %s97, %s98
      %p100 = scmp.eq.s32.totalorder %s99, 0
      %s102 = sadd.s32 %s101, 1
      %s103 = scalar_select %p100, %s101, %s102
      %p106 = pneg %p100
      %p107 = scmp.eq.s32.totalorder %s21, 1
      %p108 = por %p106, %p107
      %p109 = scmp.ne.s32.totalorder %s101, %s104
      %p110 = scmp.eq.s32.totalorder %s21, 0
      %p111 = por %p109, %p110
      %p112 = scmp.ne.s32.totalorder %s101, %s104
      %p113 = scmp.eq.s32.totalorder %s26, 1
      %p114 = por %p112, %p113
      %p115 = scmp.ne.s32.totalorder %s104, %s105
      %p116 = scmp.eq.s32.totalorder %s26, 0
      %p117 = por %p115, %p116
      %p118 = scmp.ne.s32.totalorder %s104, %s105
      %p119 = scmp.eq.s32.totalorder %s27, 1
      %p120 = por %p118, %p119
      %p122 = scmp.ne.s32.totalorder %s105, %s121
      %p123 = scmp.eq.s32.totalorder %s27, 0
      %p124 = por %p122, %p123
      %s125 = ssub.s32 %s28, %s40
      %s126 = ssub.s32 %s29, %s36
      %s127 = sor.u32 %s125, %s126
      %p128 = scmp.eq.s32.totalorder %s127, 0
      %s130 = sadd.s32 %s129, 1
      %s131 = scalar_select %p128, %s129, %s130
      %p134 = pneg %p128
      %p135 = scmp.eq.s32.totalorder %s21, 1
      %p136 = por %p134, %p135
      %p137 = scmp.ne.s32.totalorder %s129, %s132
      %p138 = scmp.eq.s32.totalorder %s21, 0
      %p139 = por %p137, %p138
      %p140 = scmp.ne.s32.totalorder %s129, %s132
      %p141 = scmp.eq.s32.totalorder %s26, 1
      %p142 = por %p140, %p141
      %p143 = scmp.ne.s32.totalorder %s132, %s133
      %p144 = scmp.eq.s32.totalorder %s26, 0
      %p145 = por %p143, %p144
      %p146 = scmp.ne.s32.totalorder %s132, %s133
      %p147 = scmp.eq.s32.totalorder %s27, 1
      %p148 = por %p146, %p147
      %p150 = scmp.ne.s32.totalorder %s133, %s149
      %p151 = scmp.eq.s32.totalorder %s27, 0
      %p152 = por %p150, %p151
      %s154 = sadd.s32 %s153, 1
      %p157 = scmp.eq.s32.totalorder %s21, 1
      %p158 = scmp.ne.s32.totalorder %s153, %s155
      %p159 = scmp.eq.s32.totalorder %s21, 0
      %p160 = por %p158, %p159
      %p161 = scmp.ne.s32.totalorder %s153, %s155
      %p162 = scmp.eq.s32.totalorder %s26, 1
      %p163 = por %p161, %p162
      %p164 = scmp.ne.s32.totalorder %s155, %s156
      %p165 = scmp.eq.s32.totalorder %s26, 0
      %p166 = por %p164, %p165
      %p167 = scmp.ne.s32.totalorder %s155, %s156
      %p168 = scmp.eq.s32.totalorder %s27, 1
      %p169 = por %p167, %p168
      %p171 = scmp.ne.s32.totalorder %s156, %s170
      %p172 = scmp.eq.s32.totalorder %s27, 0
      %p173 = por %p171, %p172
      %s175 = sadd.s32 %s174, 1
      %p178 = scmp.eq.s32.totalorder %s21, 1
      %p179 = scmp.ne.s32.totalorder %s174, %s176
      %p180 = scmp.eq.s32.totalorder %s21, 0
      %p181 = por %p179, %p180
      %p182 = scmp.ne.s32.totalorder %s174, %s176
      %p183 = scmp.eq.s32.totalorder %s26, 1
      %p184 = por %p182, %p183
      %p185 = scmp.ne.s32.totalorder %s176, %s177
      %p186 = scmp.eq.s32.totalorder %s26, 0
      %p187 = por %p185, %p186
      %p188 = scmp.ne.s32.totalorder %s176, %s177
      %p189 = scmp.eq.s32.totalorder %s27, 1
      %p190 = por %p188, %p189
      %p192 = scmp.ne.s32.totalorder %s177, %s191
      %p193 = scmp.eq.s32.totalorder %s27, 0
      %p194 = por %p192, %p193
      %s195 = ssub.s32 %s28, %s40
      %p196 = scmp.eq.s32.totalorder %s195, 0
      %s198 = sadd.s32 %s197, 1
      %s199 = scalar_select %p196, %s197, %s198
      %p202 = pneg %p196
      %p203 = scmp.eq.s32.totalorder %s21, 1
      %p204 = por %p202, %p203
      %p205 = scmp.ne.s32.totalorder %s197, %s200
      %p206 = scmp.eq.s32.totalorder %s21, 0
      %p207 = por %p205, %p206
      %p208 = scmp.ne.s32.totalorder %s197, %s200
      %p209 = scmp.eq.s32.totalorder %s26, 1
      %p210 = por %p208, %p209
      %p211 = scmp.ne.s32.totalorder %s200, %s201
      %p212 = scmp.eq.s32.totalorder %s26, 0
      %p213 = por %p211, %p212
      %p214 = scmp.ne.s32.totalorder %s200, %s201
      %p215 = scmp.eq.s32.totalorder %s27, 1
      %p216 = por %p214, %p215
      %p218 = scmp.ne.s32.totalorder %s201, %s217
      %p219 = scmp.eq.s32.totalorder %s27, 0
      %p220 = por %p218, %p219
      %s221 = ssub.s32 %s28, %s40
      %p222 = scmp.eq.s32.totalorder %s221, 0
      %s224 = sadd.s32 %s223, 1
      %s225 = scalar_select %p222, %s223, %s224
      %p228 = pneg %p222
      %p229 = scmp.eq.s32.totalorder %s21, 1
      %p230 = por %p228, %p229
      %p231 = scmp.ne.s32.totalorder %s223, %s226
      %p232 = scmp.eq.s32.totalorder %s21, 0
      %p233 = por %p231, %p232
      %p234 = scmp.ne.s32.totalorder %s223, %s226
      %p235 = scmp.eq.s32.totalorder %s26, 1
      %p236 = por %p234, %p235
      %p237 = scmp.ne.s32.totalorder %s226, %s227
      %p238 = scmp.eq.s32.totalorder %s26, 0
      %p239 = por %p237, %p238
      %p240 = scmp.ne.s32.totalorder %s226, %s227
      %p241 = scmp.eq.s32.totalorder %s27, 1
      %p242 = por %p240, %p241
      %p244 = scmp.ne.s32.totalorder %s227, %s243
      %p245 = scmp.eq.s32.totalorder %s27, 0
      %p246 = por %p244, %p245
      %s247 = ssub.s32 %s28, %s40
      %p248 = scmp.eq.s32.totalorder %s247, 0
      %s250 = sadd.s32 %s249, 1
      %s251 = scalar_select %p248, %s249, %s250
      %p254 = pneg %p248
      %p255 = scmp.eq.s32.totalorder %s21, 1
      %p256 = por %p254, %p255
      %p257 = scmp.ne.s32.totalorder %s249, %s252
      %p258 = scmp.eq.s32.totalorder %s21, 0
      %p259 = por %p257, %p258
      %p260 = scmp.ne.s32.totalorder %s249, %s252
      %p261 = scmp.eq.s32.totalorder %s26, 1
      %p262 = por %p260, %p261
      %p263 = scmp.ne.s32.totalorder %s252, %s253
      %p264 = scmp.eq.s32.totalorder %s26, 0
      %p265 = por %p263, %p264
      %p266 = scmp.ne.s32.totalorder %s252, %s253
      %p267 = scmp.eq.s32.totalorder %s27, 1
      %p268 = por %p266, %p267
      %p270 = scmp.ne.s32.totalorder %s253, %s269
      %p271 = scmp.eq.s32.totalorder %s27, 0
      %p272 = por %p270, %p271
      %s273 = ssub.s32 %s28, %s40
      %p274 = scmp.eq.s32.totalorder %s273, 0
      %s276 = sadd.s32 %s275, 1
      %s277 = scalar_select %p274, %s275, %s276
      %p280 = pneg %p274
      %p281 = scmp.eq.s32.totalorder %s21, 1
      %p282 = por %p280, %p281
      %p283 = scmp.ne.s32.totalorder %s275, %s278
      %p284 = scmp.eq.s32.totalorder %s21, 0
      %p285 = por %p283, %p284
      %p286 = scmp.ne.s32.totalorder %s275, %s278
      %p287 = scmp.eq.s32.totalorder %s26, 1
      %p288 = por %p286, %p287
      %p289 = scmp.ne.s32.totalorder %s278, %s279
      %p290 = scmp.eq.s32.totalorder %s26, 0
      %p291 = por %p289, %p290
      %p292 = scmp.ne.s32.totalorder %s278, %s279
      %p293 = scmp.eq.s32.totalorder %s27, 1
      %p294 = por %p292, %p293
      %p296 = scmp.ne.s32.totalorder %s279, %s295
      %p297 = scmp.eq.s32.totalorder %s27, 0
      %p298 = por %p296, %p297
      %s299 = ssub.s32 %s28, %s40
      %p300 = scmp.eq.s32.totalorder %s299, 0
      %s302 = sadd.s32 %s301, 1
      %s303 = scalar_select %p300, %s301, %s302
      %p306 = pneg %p300
      %p307 = scmp.eq.s32.totalorder %s21, 1
      %p308 = por %p306, %p307
      %p309 = scmp.ne.s32.totalorder %s301, %s304
      %p310 = scmp.eq.s32.totalorder %s21, 0
      %p311 = por %p309, %p310
      %p312 = scmp.ne.s32.totalorder %s301, %s304
      %p313 = scmp.eq.s32.totalorder %s26, 1
      %p314 = por %p312, %p313
      %p315 = scmp.ne.s32.totalorder %s304, %s305
      %p316 = scmp.eq.s32.totalorder %s26, 0
      %p317 = por %p315, %p316
      %p318 = scmp.ne.s32.totalorder %s304, %s305
      %p319 = scmp.eq.s32.totalorder %s27, 1
      %p320 = por %p318, %p319
      %p322 = scmp.ne.s32.totalorder %s305, %s321
      %p323 = scmp.eq.s32.totalorder %s27, 0
      %p324 = por %p322, %p323
      %s325 = ssub.s32 %s28, %s40
      %p326 = scmp.eq.s32.totalorder %s325, 0
      %s328 = sadd.s32 %s327, 1
      %s329 = scalar_select %p326, %s327, %s328
      %p332 = pneg %p326
      %p333 = scmp.eq.s32.totalorder %s21, 1
      %p334 = por %p332, %p333
      %p335 = scmp.ne.s32.totalorder %s327, %s330
      %p336 = scmp.eq.s32.totalorder %s21, 0
      %p337 = por %p335, %p336
      %p338 = scmp.ne.s32.totalorder %s327, %s330
      %p339 = scmp.eq.s32.totalorder %s26, 1
      %p340 = por %p338, %p339
      %p341 = scmp.ne.s32.totalorder %s330, %s331
      %p342 = scmp.eq.s32.totalorder %s26, 0
      %p343 = por %p341, %p342
      %p344 = scmp.ne.s32.totalorder %s330, %s331
      %p345 = scmp.eq.s32.totalorder %s27, 1
      %p346 = por %p344, %p345
      %p348 = scmp.ne.s32.totalorder %s331, %s347
      %p349 = scmp.eq.s32.totalorder %s27, 0
      %p350 = por %p348, %p349
      %s351 = ssub.s32 %s28, %s40
      %s352 = ssub.s32 %s29, %s36
      %s353 = sor.u32 %s351, %s352
      %p354 = scmp.eq.s32.totalorder %s353, 0
      %s356 = sadd.s32 %s355, 1
      %s357 = scalar_select %p354, %s355, %s356
      %p360 = pneg %p354
      %p361 = scmp.eq.s32.totalorder %s21, 1
      %p362 = por %p360, %p361
      %p363 = scmp.ne.s32.totalorder %s355, %s358
      %p364 = scmp.eq.s32.totalorder %s21, 0
      %p365 = por %p363, %p364
      %p366 = scmp.ne.s32.totalorder %s355, %s358
      %p367 = scmp.eq.s32.totalorder %s26, 1
      %p368 = por %p366, %p367
      %p369 = scmp.ne.s32.totalorder %s358, %s359
      %p370 = scmp.eq.s32.totalorder %s26, 0
      %p371 = por %p369, %p370
      %p372 = scmp.ne.s32.totalorder %s358, %s359
      %p373 = scmp.eq.s32.totalorder %s27, 1
      %p374 = por %p372, %p373
      %p376 = scmp.ne.s32.totalorder %s359, %s375
      %p377 = scmp.eq.s32.totalorder %s27, 0
      %p378 = por %p376, %p377
      %p379 = scmp.le.s32.totalorder 1, %s21
      %p380 = scmp.lt.s32.totalorder %s21, 3
      %p381 = pnand %p379, %p380
      %p382 = pneg %p381
      // Predicated region
      $region9: #{tpu_custom_call.1} parent=5 // pred_check
        _
      $region10: #{tpu_custom_call.1} parent=5 // pred_check_branch
        %384 = sbr.rel (%p381) target = $region12
      $region11: #{tpu_custom_call.1} parent=5 // pred_region
        %s385 = ssub.s32 %s21, 1
        // Predicated region
        $region13: #{tpu_custom_call.1} parent=11 // pred_check
          %p386 = pneg %p166
        $region14: #{tpu_custom_call.1} parent=11 // pred_check_branch
          %388 = sbr.rel (%p386) target = $region16
        $region15: #{tpu_custom_call.1} parent=11 // pred_region
          _
        $region16: #{tpu_custom_call.1} parent=11 // pred_fallthru
          _
        // Predicated region
        $region17: #{tpu_custom_call.1} parent=11 // pred_check
          %p389 = pneg %p187
        $region18: #{tpu_custom_call.1} parent=11 // pred_check_branch
          %391 = sbr.rel (%p389) target = $region20
        $region19: #{tpu_custom_call.1} parent=11 // pred_region
          _
        $region20: #{tpu_custom_call.1} parent=11 // pred_fallthru
          _
      $region12: #{tpu_custom_call.1} parent=5 // pred_fallthru
        _
      %p392 = scmp.lt.s32.totalorder %s21, 2
      // Predicated region
      $region21: #{tpu_custom_call.1} parent=5 // pred_check
        %p393 = pneg %p392
      $region22: #{tpu_custom_call.1} parent=5 // pred_check_branch
        %395 = sbr.rel (%p393) target = $region24
      $region23: #{tpu_custom_call.1} parent=5 // pred_region
        // Predicated region
        $region25: #{tpu_custom_call.1} parent=23 // pred_check
          %p396 = pneg %p55
        $region26: #{tpu_custom_call.1} parent=23 // pred_check_branch
          %398 = sbr.rel (%p396) target = $region28
        $region27: #{tpu_custom_call.1} parent=23 // pred_region
          %p399 = scmp.lt.s32.totalorder %s28, 1
          %s400 = scalar_select %p399, %s28, 1
          %p401 = scmp.lt.s32.totalorder %s29, 0
          %s402 = scalar_select %p401, %s29, 0
          %s403 = sadd.s32 %s402, %s400
          %s404 = smul.addr %s403, 8
          %s405 = scalar_lea.vmem %s0, %s404
        $region28: #{tpu_custom_call.1} parent=23 // pred_fallthru
          _
        // Predicated region
        $region29: #{tpu_custom_call.1} parent=23 // pred_check
          %p406 = pneg %p83
        $region30: #{tpu_custom_call.1} parent=23 // pred_check_branch
          %408 = sbr.rel (%p406) target = $region32
        $region31: #{tpu_custom_call.1} parent=23 // pred_region
          %p409 = scmp.lt.s32.totalorder %s28, 1
          %s410 = scalar_select %p409, %s28, 1
          %p411 = scmp.lt.s32.totalorder %s29, 0
          %s412 = scalar_select %p411, %s29, 0
          %s413 = sadd.s32 %s412, %s410
          %s414 = smul.addr %s413, 8
          %s415 = scalar_lea.vmem %s1, %s414
        $region32: #{tpu_custom_call.1} parent=23 // pred_fallthru
          _
        // Predicated region
        $region33: #{tpu_custom_call.1} parent=23 // pred_check
          %p416 = pneg %p111
        $region34: #{tpu_custom_call.1} parent=23 // pred_check_branch
          %418 = sbr.rel (%p416) target = $region36
        $region35: #{tpu_custom_call.1} parent=23 // pred_region
          %p419 = scmp.lt.s32.totalorder %s28, 1
          %s420 = scalar_select %p419, %s28, 1
          %p421 = scmp.lt.s32.totalorder %s29, 0
          %s422 = scalar_select %p421, %s29, 0
          %s423 = sadd.s32 %s422, %s420
          %s424 = smul.addr %s423, 8
          %s425 = scalar_lea.vmem %s2, %s424
        $region36: #{tpu_custom_call.1} parent=23 // pred_fallthru
          _
        // Predicated region
        $region37: #{tpu_custom_call.1} parent=23 // pred_check
          %p426 = pneg %p139
        $region38: #{tpu_custom_call.1} parent=23 // pred_check_branch
          %428 = sbr.rel (%p426) target = $region40
        $region39: #{tpu_custom_call.1} parent=23 // pred_region
          %p429 = scmp.lt.s32.totalorder %s28, 1
          %s430 = scalar_select %p429, %s28, 1
          %p431 = scmp.lt.s32.totalorder %s29, 0
          %s432 = scalar_select %p431, %s29, 0
          %s433 = sadd.s32 %s432, %s430
          %s434 = smul.addr %s433, 8
          %s435 = scalar_lea.vmem %s3, %s434
        $region40: #{tpu_custom_call.1} parent=23 // pred_fallthru
          _
        // Predicated region
        $region41: #{tpu_custom_call.1} parent=23 // pred_check
          %p436 = pneg %p207
        $region42: #{tpu_custom_call.1} parent=23 // pred_check_branch
          %438 = sbr.rel (%p436) target = $region44
        $region43: #{tpu_custom_call.1} parent=23 // pred_region
          %p439 = scmp.lt.s32.totalorder %s28, 1
          %s440 = scalar_select %p439, %s28, 1
          %s441 = smul.addr %s440, 16
          %s442 = smul.addr %s441, 8
          %s443 = scalar_lea.vmem %s6, %s442
        $region44: #{tpu_custom_call.1} parent=23 // pred_fallthru
          _
        // Predicated region
        $region45: #{tpu_custom_call.1} parent=23 // pred_check
          %p444 = pneg %p233
        $region46: #{tpu_custom_call.1} parent=23 // pred_check_branch
          %446 = sbr.rel (%p444) target = $region48
        $region47: #{tpu_custom_call.1} parent=23 // pred_region
          %p447 = scmp.lt.s32.totalorder %s28, 1
          %s448 = scalar_select %p447, %s28, 1
          %s449 = scalar_lea.vmem %s7, %s448
        $region48: #{tpu_custom_call.1} parent=23 // pred_fallthru
          _
        // Predicated region
        $region49: #{tpu_custom_call.1} parent=23 // pred_check
          %p450 = pneg %p259
        $region50: #{tpu_custom_call.1} parent=23 // pred_check_branch
          %452 = sbr.rel (%p450) target = $region52
        $region51: #{tpu_custom_call.1} parent=23 // pred_region
          %p453 = scmp.lt.s32.totalorder %s28, 1
          %s454 = scalar_select %p453, %s28, 1
          %s455 = smul.addr %s454, 16
          %s456 = smul.addr %s455, 8
          %s457 = scalar_lea.vmem %s8, %s456
        $region52: #{tpu_custom_call.1} parent=23 // pred_fallthru
          _
        // Predicated region
        $region53: #{tpu_custom_call.1} parent=23 // pred_check
          %p458 = pneg %p285
        $region54: #{tpu_custom_call.1} parent=23 // pred_check_branch
          %460 = sbr.rel (%p458) target = $region56
        $region55: #{tpu_custom_call.1} parent=23 // pred_region
          %p461 = scmp.lt.s32.totalorder %s28, 1
          %s462 = scalar_select %p461, %s28, 1
          %s463 = scalar_lea.vmem %s9, %s462
        $region56: #{tpu_custom_call.1} parent=23 // pred_fallthru
          _
        // Predicated region
        $region57: #{tpu_custom_call.1} parent=23 // pred_check
          %p464 = pneg %p311
        $region58: #{tpu_custom_call.1} parent=23 // pred_check_branch
          %466 = sbr.rel (%p464) target = $region60
        $region59: #{tpu_custom_call.1} parent=23 // pred_region
          %p467 = scmp.lt.s32.totalorder %s28, 1
          %s468 = scalar_select %p467, %s28, 1
          %s469 = smul.addr %s468, 16
          %s470 = smul.addr %s469, 8
          %s471 = scalar_lea.vmem %s10, %s470
        $region60: #{tpu_custom_call.1} parent=23 // pred_fallthru
          _
        // Predicated region
        $region61: #{tpu_custom_call.1} parent=23 // pred_check
          %p472 = pneg %p337
        $region62: #{tpu_custom_call.1} parent=23 // pred_check_branch
          %474 = sbr.rel (%p472) target = $region64
        $region63: #{tpu_custom_call.1} parent=23 // pred_region
          %p475 = scmp.lt.s32.totalorder %s28, 1
          %s476 = scalar_select %p475, %s28, 1
          %s477 = scalar_lea.vmem %s11, %s476
        $region64: #{tpu_custom_call.1} parent=23 // pred_fallthru
          _
      $region24: #{tpu_custom_call.1} parent=5 // pred_fallthru
        _
      %p478 = scmp.le.s32.totalorder 1, %s21
      %p479 = scmp.lt.s32.totalorder %s21, 3
      %p480 = pnand %p478, %p479
      %p481 = pneg %p480
      // Predicated region
      $region65: #{tpu_custom_call.1} parent=5 // pred_check
        _
      $region66: #{tpu_custom_call.1} parent=5 // pred_check_branch
        %483 = sbr.rel (%p480) target = $region68
      $region67: #{tpu_custom_call.1} parent=5 // pred_region
        %s484 = ssub.s32 %s21, 1
        %p485 = scmp.lt.s32.totalorder %s30, 1
        %s486 = scalar_select %p485, %s30, 1
        %p487 = scmp.lt.s32.totalorder %s31, 0
        %s488 = scalar_select %p487, %s31, 0
        %s489 = sadd.s32 %s488, %s486
        %s490 = smul.addr %s489, 8
        %s491 = scalar_lea.vmem %s0, %s490
        %p492 = pneg %p61
        %p493 = pneg %p58
        %p494 = scmp.lt.s32.totalorder %s30, 1
        %s495 = scalar_select %p494, %s30, 1
        %p496 = scmp.lt.s32.totalorder %s31, 0
        %s497 = scalar_select %p496, %s31, 0
        %s498 = sadd.s32 %s497, %s495
        %s499 = smul.addr %s498, 8
        %s500 = scalar_lea.vmem %s1, %s499
        %p501 = pneg %p89
        %p502 = pneg %p86
        %p503 = scmp.lt.s32.totalorder %s30, 1
        %s504 = scalar_select %p503, %s30, 1
        %p505 = scmp.lt.s32.totalorder %s31, 0
        %s506 = scalar_select %p505, %s31, 0
        %s507 = sadd.s32 %s506, %s504
        %s508 = smul.addr %s507, 8
        %s509 = scalar_lea.vmem %s2, %s508
        %p510 = pneg %p117
        %p511 = pneg %p114
        %p512 = scmp.lt.s32.totalorder %s30, 1
        %s513 = scalar_select %p512, %s30, 1
        %p514 = scmp.lt.s32.totalorder %s31, 0
        %s515 = scalar_select %p514, %s31, 0
        %s516 = sadd.s32 %s515, %s513
        %s517 = smul.addr %s516, 8
        %s518 = scalar_lea.vmem %s3, %s517
        %p519 = pneg %p145
        %p520 = pneg %p142
        %p521 = pneg %p166
        %p522 = pneg %p163
        %p523 = pneg %p187
        %p524 = pneg %p184
        %p525 = scmp.lt.s32.totalorder %s30, 1
        %s526 = scalar_select %p525, %s30, 1
        %s527 = smul.addr %s526, 16
        %s528 = smul.addr %s527, 8
        %s529 = scalar_lea.vmem %s6, %s528
        %p530 = pneg %p213
        %p531 = pneg %p210
        %p532 = scmp.lt.s32.totalorder %s30, 1
        %s533 = scalar_select %p532, %s30, 1
        %s534 = scalar_lea.vmem %s7, %s533
        %p535 = pneg %p239
        %p536 = pneg %p236
        %p537 = scmp.lt.s32.totalorder %s30, 1
        %s538 = scalar_select %p537, %s30, 1
        %s539 = smul.addr %s538, 16
        %s540 = smul.addr %s539, 8
        %s541 = scalar_lea.vmem %s8, %s540
        %p542 = pneg %p265
        %p543 = pneg %p262
        %p544 = scmp.lt.s32.totalorder %s30, 1
        %s545 = scalar_select %p544, %s30, 1
        %s546 = scalar_lea.vmem %s9, %s545
        %p547 = pneg %p291
        %p548 = pneg %p288
        %p549 = scmp.lt.s32.totalorder %s30, 1
        %s550 = scalar_select %p549, %s30, 1
        %s551 = smul.addr %s550, 16
        %s552 = smul.addr %s551, 8
        %s553 = scalar_lea.vmem %s10, %s552
        %p554 = pneg %p317
        %p555 = pneg %p314
        %p556 = scmp.lt.s32.totalorder %s30, 1
        %s557 = scalar_select %p556, %s30, 1
        %s558 = scalar_lea.vmem %s11, %s557
        %p559 = pneg %p343
        %p560 = pneg %p340
        %p561 = pneg %p371
        %p562 = pneg %p368
        %s563 = sand.u32 %s358, 1
        %s564 = scalar_lea.sflag [#allocation3], %s563
        %s565 = sand.u32 %s358, 1
        %s566 = smul.addr %s565, 16
        %s567 = scalar_lea.vmem [#allocation2], %s566
        %p568 = scmp.lt.s32.totalorder %s30, 1
        %s569 = scalar_select %p568, %s30, 1
        %p570 = scmp.lt.s32.totalorder %s31, 0
        %s571 = scalar_select %p570, %s31, 0
        %s572 = sadd.s32 %s571, %s569
        %s573 = smul.addr %s572, 8
        %s574 = scalar_lea.vmem %s0, %s573
        %p575 = scmp.lt.s32.totalorder %s30, 1
        %s576 = scalar_select %p575, %s30, 1
        %p577 = scmp.lt.s32.totalorder %s31, 0
        %s578 = scalar_select %p577, %s31, 0
        %s579 = sadd.s32 %s578, %s576
        %s580 = smul.addr %s579, 8
        %s581 = scalar_lea.vmem %s1, %s580
        %p582 = scmp.lt.s32.totalorder %s30, 1
        %s583 = scalar_select %p582, %s30, 1
        %p584 = scmp.lt.s32.totalorder %s31, 0
        %s585 = scalar_select %p584, %s31, 0
        %s586 = sadd.s32 %s585, %s583
        %s587 = smul.addr %s586, 8
        %s588 = scalar_lea.vmem %s2, %s587
        %p589 = scmp.lt.s32.totalorder %s30, 1
        %s590 = scalar_select %p589, %s30, 1
        %p591 = scmp.lt.s32.totalorder %s31, 0
        %s592 = scalar_select %p591, %s31, 0
        %s593 = sadd.s32 %s592, %s590
        %s594 = smul.addr %s593, 8
        %s595 = scalar_lea.vmem %s3, %s594
        %p596 = scmp.lt.s32.totalorder %s30, 1
        %s597 = scalar_select %p596, %s30, 1
        %s598 = smul.addr %s597, 16
        %s599 = smul.addr %s598, 8
        %s600 = scalar_lea.vmem %s6, %s599
        %p601 = scmp.lt.s32.totalorder %s30, 1
        %s602 = scalar_select %p601, %s30, 1
        %s603 = scalar_lea.vmem %s7, %s602
        %p604 = scmp.lt.s32.totalorder %s30, 1
        %s605 = scalar_select %p604, %s30, 1
        %s606 = smul.addr %s605, 16
        %s607 = smul.addr %s606, 8
        %s608 = scalar_lea.vmem %s8, %s607
        %p609 = scmp.lt.s32.totalorder %s30, 1
        %s610 = scalar_select %p609, %s30, 1
        %s611 = scalar_lea.vmem %s9, %s610
        %p612 = scmp.lt.s32.totalorder %s30, 1
        %s613 = scalar_select %p612, %s30, 1
        %s614 = smul.addr %s613, 16
        %s615 = smul.addr %s614, 8
        %s616 = scalar_lea.vmem %s10, %s615
        %p617 = scmp.lt.s32.totalorder %s30, 1
        %s618 = scalar_select %p617, %s30, 1
        %s619 = scalar_lea.vmem %s11, %s618
        %v620 = vld [vmem:[%s574] sm:$0xff]
        %v621 = vld [vmem:[%s4] sm:$0x3f]
        %v622 = vld [vmem:[%s5] sm:$0x1]
        %v624 = vlaneseq
        %v625 = vshrl.u32 %v624, 7
        %v626 = vsub.s32 0, %v625
        %v627 = vrot.slane %v622, %v626
        %vm629 = vcmask 48128
        %v631 = vsel %vm629, %v620, 0
        %vm633 = vcmask 1045504
        %v635 = vsel %vm633, %v621, 0
        %637 = vmatprep.subr.mxu0 0.0
        %638 = vmatpush1.msra.mxu0 0.0
        %639 = vmatprep.subr.mxu0 0.0
        %640 = vmatpush1.msra.mxu0 0.0
        %641 = vmatprep.subr.mxu0 0.0
        %642 = vmatpush1.msra.mxu0 0.0
        %643 = vmatprep.subr.mxu0 0.0
        %644 = vmatpush1.msra.mxu0 0.0
        %645 = vmatprep.subr.mxu0 0.0
        %646 = vmatpush1.msra.mxu0 0.0
        %647 = vmatprep.subr.mxu0 0.0
        %648 = vmatpush1.msra.mxu0 0.0
        %649 = vmatprep.subr.mxu0 0.0
        %650 = vmatpush1.msra.mxu0 0.0
        %651 = vmatprep.subr.mxu0 0.0
        %652 = vmatpush1.msra.mxu0 0.0
        %653 = vmatprep.subr.mxu0 0.0
        %654 = vmatpush1.msra.mxu0 0.0
        %655 = vmatprep.subr.mxu0 0.0
        %656 = vmatpush1.msra.mxu0 0.0
        %657 = vmatprep.subr.mxu0 0.0
        %658 = vmatpush1.msra.mxu0 0.0
        %659 = vmatprep.subr.mxu0 0.0
        %660 = vmatpush1.msra.mxu0 0.0
        %661 = vmatprep.subr.mxu0 0.0
        %662 = vmatpush1.msra.mxu0 0.0
        %663 = vmatprep.subr.mxu0 0.0
        %664 = vmatpush1.msra.mxu0 0.0
        %665 = vmatprep.subr.mxu0 0.0
        %666 = vmatpush1.msra.mxu0 0.0
        %667 = vmatprep.subr.mxu0 0.0
        %668 = vmatpush1.msra.mxu0 %v635
        %669 = vmatprep.subr.mxu0 0.0
        %670 = vmatpush2.msra.mxu0 0.0
        %671 = vmatprep.subr.mxu0 0.0
        %672 = vmatpush2.msra.mxu0 0.0
        %673 = vmatprep.subr.mxu0 0.0
        %674 = vmatpush2.msra.mxu0 0.0
        %675 = vmatprep.subr.mxu0 0.0
        %676 = vmatpush2.msra.mxu0 0.0
        %677 = vmatprep.subr.mxu0 0.0
        %678 = vmatpush2.msra.mxu0 0.0
        %679 = vmatprep.subr.mxu0 0.0
        %680 = vmatpush2.msra.mxu0 0.0
        %681 = vmatprep.subr.mxu0 0.0
        %682 = vmatpush2.msra.mxu0 0.0
        %683 = vmatprep.subr.mxu0 0.0
        %684 = vmatpush2.msra.mxu0 0.0
        %685 = vmatprep.subr.mxu0 0.0
        %686 = vmatpush2.msra.mxu0 0.0
        %687 = vmatprep.subr.mxu0 0.0
        %688 = vmatpush2.msra.mxu0 0.0
        %689 = vmatprep.subr.mxu0 0.0
        %690 = vmatpush2.msra.mxu0 0.0
        %691 = vmatprep.subr.mxu0 0.0
        %692 = vmatpush2.msra.mxu0 0.0
        %693 = vmatprep.subr.mxu0 0.0
        %694 = vmatpush2.msra.mxu0 0.0
        %695 = vmatprep.subr.mxu0 0.0
        %696 = vmatpush2.msra.mxu0 0.0
        %697 = vmatprep.subr.mxu0 0.0
        %698 = vmatpush2.msra.mxu0 0.0
        %699 = vmatprep.subr.mxu0 0.0
        %700 = vmatpush2.msra.mxu0 0.0
        %701 = vmatprep.mubr.f32.mxu0 0.0
        %702 = vmatmul.mubr.f32.gmra.mxu0 %v631
        %v703 = vpop.f32.mrf.mxu0
        %v704 = vadd.f32 %v627, %v703
        %v705 = vpop.f32.mrf.mxu0
        %706 = vdwg.mxu0
        %v707 = vld [vmem:[%s581] sm:$0xff]
        %v708 = vld [vmem:[%s600] sm:$0xff]
        %v709 = vld [vmem:[%s600 + $0x8] sm:$0xff]
        %v710 = vld [vmem:[%s600 + $0x10] sm:$0xff]
        %v711 = vld [vmem:[%s600 + $0x18] sm:$0xff]
        %v712 = vld [vmem:[%s600 + $0x20] sm:$0xff]
        %v713 = vld [vmem:[%s600 + $0x28] sm:$0xff]
        %v714 = vld [vmem:[%s600 + $0x30] sm:$0xff]
        %v715 = vld [vmem:[%s600 + $0x38] sm:$0xff]
        %v716 = vld [vmem:[%s600 + $0x40] sm:$0xff]
        %v717 = vld [vmem:[%s600 + $0x48] sm:$0xff]
        %v718 = vld [vmem:[%s600 + $0x50] sm:$0xff]
        %v719 = vld [vmem:[%s600 + $0x58] sm:$0xff]
        %v720 = vld [vmem:[%s600 + $0x60] sm:$0xff]
        %v721 = vld [vmem:[%s600 + $0x68] sm:$0xff]
        %v722 = vld [vmem:[%s600 + $0x70] sm:$0xff]
        %v723 = vld [vmem:[%s600 + $0x78] sm:$0xff]
        %v724 = vld [vmem:[%s603] sm:$0x1]
        %v726 = vlaneseq
        %v727 = vshrl.u32 %v726, 7
        %v728 = vsub.s32 0, %v727
        %v729 = vrot.slane %v724, %v728
        %731 = vmatprep.subr.mxu0 0.0
        %732 = vmatpush1.msra.mxu0 %v723
        %733 = vmatprep.subr.mxu0 0.0
        %734 = vmatpush1.msra.mxu0 %v722
        %735 = vmatprep.subr.mxu0 0.0
        %736 = vmatpush1.msra.mxu0 %v721
        %737 = vmatprep.subr.mxu0 0.0
        %738 = vmatpush1.msra.mxu0 %v720
        %739 = vmatprep.subr.mxu0 0.0
        %740 = vmatpush1.msra.mxu0 %v719
        %741 = vmatprep.subr.mxu0 0.0
        %742 = vmatpush1.msra.mxu0 %v718
        %743 = vmatprep.subr.mxu0 0.0
        %744 = vmatpush1.msra.mxu0 %v717
        %745 = vmatprep.subr.mxu0 0.0
        %746 = vmatpush1.msra.mxu0 %v716
        %747 = vmatprep.subr.mxu0 0.0
        %748 = vmatpush1.msra.mxu0 %v715
        %749 = vmatprep.subr.mxu0 0.0
        %750 = vmatpush1.msra.mxu0 %v714
        %751 = vmatprep.subr.mxu0 0.0
        %752 = vmatpush1.msra.mxu0 %v713
        %753 = vmatprep.subr.mxu0 0.0
        %754 = vmatpush1.msra.mxu0 %v712
        %755 = vmatprep.subr.mxu0 0.0
        %756 = vmatpush1.msra.mxu0 %v711
        %757 = vmatprep.subr.mxu0 0.0
        %758 = vmatpush1.msra.mxu0 %v710
        %759 = vmatprep.subr.mxu0 0.0
        %760 = vmatpush1.msra.mxu0 %v709
        %761 = vmatprep.subr.mxu0 0.0
        %762 = vmatpush1.msra.mxu0 %v708
        %763 = vmatprep.subr.mxu0 0.0
        %764 = vmatpush2.msra.mxu0 0.0
        %765 = vmatprep.subr.mxu0 0.0
        %766 = vmatpush2.msra.mxu0 0.0
        %767 = vmatprep.subr.mxu0 0.0
        %768 = vmatpush2.msra.mxu0 0.0
        %769 = vmatprep.subr.mxu0 0.0
        %770 = vmatpush2.msra.mxu0 0.0
        %771 = vmatprep.subr.mxu0 0.0
        %772 = vmatpush2.msra.mxu0 0.0
        %773 = vmatprep.subr.mxu0 0.0
        %774 = vmatpush2.msra.mxu0 0.0
        %775 = vmatprep.subr.mxu0 0.0
        %776 = vmatpush2.msra.mxu0 0.0
        %777 = vmatprep.subr.mxu0 0.0
        %778 = vmatpush2.msra.mxu0 0.0
        %779 = vmatprep.subr.mxu0 0.0
        %780 = vmatpush2.msra.mxu0 0.0
        %781 = vmatprep.subr.mxu0 0.0
        %782 = vmatpush2.msra.mxu0 0.0
        %783 = vmatprep.subr.mxu0 0.0
        %784 = vmatpush2.msra.mxu0 0.0
        %785 = vmatprep.subr.mxu0 0.0
        %786 = vmatpush2.msra.mxu0 0.0
        %787 = vmatprep.subr.mxu0 0.0
        %788 = vmatpush2.msra.mxu0 0.0
        %789 = vmatprep.subr.mxu0 0.0
        %790 = vmatpush2.msra.mxu0 0.0
        %791 = vmatprep.subr.mxu0 0.0
        %792 = vmatpush2.msra.mxu0 0.0
        %793 = vmatprep.subr.mxu0 0.0
        %794 = vmatpush2.msra.mxu0 0.0
        %795 = vmatprep.mubr.f32.mxu0 0.0
        %796 = vmatmul.mubr.f32.gmra.mxu0 %v707
        %v797 = vpop.f32.mrf.mxu0
        %v798 = vadd.f32 %v729, %v797
        %v799 = vpop.f32.mrf.mxu0
        %800 = vdwg.mxu0
        %v801 = vld [vmem:[%s588] sm:$0xff]
        %v802 = vld [vmem:[%s608] sm:$0xff]
        %v803 = vld [vmem:[%s608 + $0x8] sm:$0xff]
        %v804 = vld [vmem:[%s608 + $0x10] sm:$0xff]
        %v805 = vld [vmem:[%s608 + $0x18] sm:$0xff]
        %v806 = vld [vmem:[%s608 + $0x20] sm:$0xff]
        %v807 = vld [vmem:[%s608 + $0x28] sm:$0xff]
        %v808 = vld [vmem:[%s608 + $0x30] sm:$0xff]
        %v809 = vld [vmem:[%s608 + $0x38] sm:$0xff]
        %v810 = vld [vmem:[%s608 + $0x40] sm:$0xff]
        %v811 = vld [vmem:[%s608 + $0x48] sm:$0xff]
        %v812 = vld [vmem:[%s608 + $0x50] sm:$0xff]
        %v813 = vld [vmem:[%s608 + $0x58] sm:$0xff]
        %v814 = vld [vmem:[%s608 + $0x60] sm:$0xff]
        %v815 = vld [vmem:[%s608 + $0x68] sm:$0xff]
        %v816 = vld [vmem:[%s608 + $0x70] sm:$0xff]
        %v817 = vld [vmem:[%s608 + $0x78] sm:$0xff]
        %v818 = vld [vmem:[%s611] sm:$0x1]
        %v820 = vlaneseq
        %v821 = vshrl.u32 %v820, 7
        %v822 = vsub.s32 0, %v821
        %v823 = vrot.slane %v818, %v822
        %825 = vmatprep.subr.mxu0 0.0
        %826 = vmatpush1.msra.mxu0 %v817
        %827 = vmatprep.subr.mxu0 0.0
        %828 = vmatpush1.msra.mxu0 %v816
        %829 = vmatprep.subr.mxu0 0.0
        %830 = vmatpush1.msra.mxu0 %v815
        %831 = vmatprep.subr.mxu0 0.0
        %832 = vmatpush1.msra.mxu0 %v814
        %833 = vmatprep.subr.mxu0 0.0
        %834 = vmatpush1.msra.mxu0 %v813
        %835 = vmatprep.subr.mxu0 0.0
        %836 = vmatpush1.msra.mxu0 %v812
        %837 = vmatprep.subr.mxu0 0.0
        %838 = vmatpush1.msra.mxu0 %v811
        %839 = vmatprep.subr.mxu0 0.0
        %840 = vmatpush1.msra.mxu0 %v810
        %841 = vmatprep.subr.mxu0 0.0
        %842 = vmatpush1.msra.mxu0 %v809
        %843 = vmatprep.subr.mxu0 0.0
        %844 = vmatpush1.msra.mxu0 %v808
        %845 = vmatprep.subr.mxu0 0.0
        %846 = vmatpush1.msra.mxu0 %v807
        %847 = vmatprep.subr.mxu0 0.0
        %848 = vmatpush1.msra.mxu0 %v806
        %849 = vmatprep.subr.mxu0 0.0
        %850 = vmatpush1.msra.mxu0 %v805
        %851 = vmatprep.subr.mxu0 0.0
        %852 = vmatpush1.msra.mxu0 %v804
        %853 = vmatprep.subr.mxu0 0.0
        %854 = vmatpush1.msra.mxu0 %v803
        %855 = vmatprep.subr.mxu0 0.0
        %856 = vmatpush1.msra.mxu0 %v802
        %857 = vmatprep.subr.mxu0 0.0
        %858 = vmatpush2.msra.mxu0 0.0
        %859 = vmatprep.subr.mxu0 0.0
        %860 = vmatpush2.msra.mxu0 0.0
        %861 = vmatprep.subr.mxu0 0.0
        %862 = vmatpush2.msra.mxu0 0.0
        %863 = vmatprep.subr.mxu0 0.0
        %864 = vmatpush2.msra.mxu0 0.0
        %865 = vmatprep.subr.mxu0 0.0
        %866 = vmatpush2.msra.mxu0 0.0
        %867 = vmatprep.subr.mxu0 0.0
        %868 = vmatpush2.msra.mxu0 0.0
        %869 = vmatprep.subr.mxu0 0.0
        %870 = vmatpush2.msra.mxu0 0.0
        %871 = vmatprep.subr.mxu0 0.0
        %872 = vmatpush2.msra.mxu0 0.0
        %873 = vmatprep.subr.mxu0 0.0
        %874 = vmatpush2.msra.mxu0 0.0
        %875 = vmatprep.subr.mxu0 0.0
        %876 = vmatpush2.msra.mxu0 0.0
        %877 = vmatprep.subr.mxu0 0.0
        %878 = vmatpush2.msra.mxu0 0.0
        %879 = vmatprep.subr.mxu0 0.0
        %880 = vmatpush2.msra.mxu0 0.0
        %881 = vmatprep.subr.mxu0 0.0
        %882 = vmatpush2.msra.mxu0 0.0
        %883 = vmatprep.subr.mxu0 0.0
        %884 = vmatpush2.msra.mxu0 0.0
        %885 = vmatprep.subr.mxu0 0.0
        %886 = vmatpush2.msra.mxu0 0.0
        %887 = vmatprep.subr.mxu0 0.0
        %888 = vmatpush2.msra.mxu0 0.0
        %889 = vmatprep.mubr.f32.mxu0 0.0
        %890 = vmatmul.mubr.f32.gmra.mxu0 %v801
        %v891 = vpop.f32.mrf.mxu0
        %v892 = vadd.f32 %v823, %v891
        %v893 = vpop.f32.mrf.mxu0
        %894 = vdwg.mxu0
        %v895 = vld [vmem:[%s595] sm:$0xff]
        %v896 = vld [vmem:[%s616] sm:$0xff]
        %v897 = vld [vmem:[%s616 + $0x8] sm:$0xff]
        %v898 = vld [vmem:[%s616 + $0x10] sm:$0xff]
        %v899 = vld [vmem:[%s616 + $0x18] sm:$0xff]
        %v900 = vld [vmem:[%s616 + $0x20] sm:$0xff]
        %v901 = vld [vmem:[%s616 + $0x28] sm:$0xff]
        %v902 = vld [vmem:[%s616 + $0x30] sm:$0xff]
        %v903 = vld [vmem:[%s616 + $0x38] sm:$0xff]
        %v904 = vld [vmem:[%s616 + $0x40] sm:$0xff]
        %v905 = vld [vmem:[%s616 + $0x48] sm:$0xff]
        %v906 = vld [vmem:[%s616 + $0x50] sm:$0xff]
        %v907 = vld [vmem:[%s616 + $0x58] sm:$0xff]
        %v908 = vld [vmem:[%s616 + $0x60] sm:$0xff]
        %v909 = vld [vmem:[%s616 + $0x68] sm:$0xff]
        %v910 = vld [vmem:[%s616 + $0x70] sm:$0xff]
        %v911 = vld [vmem:[%s616 + $0x78] sm:$0xff]
        %v912 = vld [vmem:[%s619] sm:$0x1]
        %v914 = vlaneseq
        %v915 = vshrl.u32 %v914, 7
        %v916 = vsub.s32 0, %v915
        %v917 = vrot.slane %v912, %v916
        %919 = vmatprep.subr.mxu0 0.0
        %920 = vmatpush1.msra.mxu0 %v911
        %921 = vmatprep.subr.mxu0 0.0
        %922 = vmatpush1.msra.mxu0 %v910
        %923 = vmatprep.subr.mxu0 0.0
        %924 = vmatpush1.msra.mxu0 %v909
        %925 = vmatprep.subr.mxu0 0.0
        %926 = vmatpush1.msra.mxu0 %v908
        %927 = vmatprep.subr.mxu0 0.0
        %928 = vmatpush1.msra.mxu0 %v907
        %929 = vmatprep.subr.mxu0 0.0
        %930 = vmatpush1.msra.mxu0 %v906
        %931 = vmatprep.subr.mxu0 0.0
        %932 = vmatpush1.msra.mxu0 %v905
        %933 = vmatprep.subr.mxu0 0.0
        %934 = vmatpush1.msra.mxu0 %v904
        %935 = vmatprep.subr.mxu0 0.0
        %936 = vmatpush1.msra.mxu0 %v903
        %937 = vmatprep.subr.mxu0 0.0
        %938 = vmatpush1.msra.mxu0 %v902
        %939 = vmatprep.subr.mxu0 0.0
        %940 = vmatpush1.msra.mxu0 %v901
        %941 = vmatprep.subr.mxu0 0.0
        %942 = vmatpush1.msra.mxu0 %v900
        %943 = vmatprep.subr.mxu0 0.0
        %944 = vmatpush1.msra.mxu0 %v899
        %945 = vmatprep.subr.mxu0 0.0
        %946 = vmatpush1.msra.mxu0 %v898
        %947 = vmatprep.subr.mxu0 0.0
        %948 = vmatpush1.msra.mxu0 %v897
        %949 = vmatprep.subr.mxu0 0.0
        %950 = vmatpush1.msra.mxu0 %v896
        %951 = vmatprep.subr.mxu0 0.0
        %952 = vmatpush2.msra.mxu0 0.0
        %953 = vmatprep.subr.mxu0 0.0
        %954 = vmatpush2.msra.mxu0 0.0
        %955 = vmatprep.subr.mxu0 0.0
        %956 = vmatpush2.msra.mxu0 0.0
        %957 = vmatprep.subr.mxu0 0.0
        %958 = vmatpush2.msra.mxu0 0.0
        %959 = vmatprep.subr.mxu0 0.0
        %960 = vmatpush2.msra.mxu0 0.0
        %961 = vmatprep.subr.mxu0 0.0
        %962 = vmatpush2.msra.mxu0 0.0
        %963 = vmatprep.subr.mxu0 0.0
        %964 = vmatpush2.msra.mxu0 0.0
        %965 = vmatprep.subr.mxu0 0.0
        %966 = vmatpush2.msra.mxu0 0.0
        %967 = vmatprep.subr.mxu0 0.0
        %968 = vmatpush2.msra.mxu0 0.0
        %969 = vmatprep.subr.mxu0 0.0
        %970 = vmatpush2.msra.mxu0 0.0
        %971 = vmatprep.subr.mxu0 0.0
        %972 = vmatpush2.msra.mxu0 0.0
        %973 = vmatprep.subr.mxu0 0.0
        %974 = vmatpush2.msra.mxu0 0.0
        %975 = vmatprep.subr.mxu0 0.0
        %976 = vmatpush2.msra.mxu0 0.0
        %977 = vmatprep.subr.mxu0 0.0
        %978 = vmatpush2.msra.mxu0 0.0
        %979 = vmatprep.subr.mxu0 0.0
        %980 = vmatpush2.msra.mxu0 0.0
        %981 = vmatprep.subr.mxu0 0.0
        %982 = vmatpush2.msra.mxu0 0.0
        %983 = vmatprep.mubr.f32.mxu0 0.0
        %984 = vmatmul.mubr.f32.gmra.mxu0 %v895
        %v985 = vpop.f32.mrf.mxu0
        %v986 = vadd.f32 %v917, %v985
        %v987 = vpop.f32.mrf.mxu0
        %988 = vdwg.mxu0
        %989 = vst [vmem:[%s567] sm:$0xff] %v704
        %v990 = vadd.f32 %v798, %v892
        %vm991 = vcmask 523264
        %992 = vst.msk [vmem:[%s567 + $0x8] sm:$0xff] %vm991, %v990
        %v993 = vadd.f32 %v798, %v986
        %995 = vrot.lane.b32.xlu0 %v993, 64
        %v996 = vpop.permute.xlu0 %995
        %vm998 = vcmask 1048064
        %999 = vst.msk [vmem:[%s567 + $0x8] sm:$0xff] %vm998, %v996
        %s1000 = sand.u32 %s358, 1
        %s1001 = scalar_lea.sflag [#allocation3], %s1000
        %s1002 = sand.u32 %s358, 1
        %s1003 = smul.addr %s1002, 16
        %s1004 = scalar_lea.vmem [#allocation2], %s1003
        // Predicated region
        $region69: #{tpu_custom_call.1} parent=67 // pred_check
          %p1005 = pneg %p368
        $region70: #{tpu_custom_call.1} parent=67 // pred_check_branch
          %1007 = sbr.rel (%p1005) target = $region72
        $region71: #{tpu_custom_call.1} parent=67 // pred_region
          %s1009 = ssub.s32 256, 256
          %1010 = vsyncadd %s1001, %s1009
          %s1011 = smul.addr %s31, 2
          %s1012 = smul.addr %s30, 2
          %s1013 = sadd.s32 %s1011, %s1012
          %s1014 = smul.addr %s1013, 128
          %s1015 = scalar_lea.hbm %s12, %s1014
          %s1017 = sshll.u32 %s1004, 4
          %s1018 = int_to_ptr.vmem [resolvable:$true] %s1017
          %1020 = dma.vmem_to_hbm [thread:$0]  %s1018, 256, %s1015, %s1001
        $region72: #{tpu_custom_call.1} parent=67 // pred_fallthru
          _
      $region68: #{tpu_custom_call.1} parent=5 // pred_fallthru
        _
      %p1021 = scmp.le.s32.totalorder 2, %s21
      // Predicated region
      $region73: #{tpu_custom_call.1} parent=5 // pred_check
        %p1022 = pneg %p1021
      $region74: #{tpu_custom_call.1} parent=5 // pred_check_branch
        %1024 = sbr.rel (%p1022) target = $region76
      $region75: #{tpu_custom_call.1} parent=5 // pred_region
        %s1025 = ssub.s32 %s21, 2
        // Predicated region
        $region77: #{tpu_custom_call.1} parent=75 // pred_check
          %p1026 = pneg %p374
        $region78: #{tpu_custom_call.1} parent=75 // pred_check_branch
          %1028 = sbr.rel (%p1026) target = $region80
        $region79: #{tpu_custom_call.1} parent=75 // pred_region
          %s1029 = sand.u32 %s359, 1
          %s1030 = scalar_lea.sflag [#allocation3], %s1029
          %s1031 = sand.u32 %s359, 1
          %s1032 = smul.addr %s1031, 16
          %s1033 = scalar_lea.vmem [#allocation2], %s1032
          %1034 = dma.done %s1030, 256
        $region80: #{tpu_custom_call.1} parent=75 // pred_fallthru
          _
      $region76: #{tpu_custom_call.1} parent=5 // pred_fallthru
        _
    $region6: #{tpu_custom_call.1} parent=1 // loop_footer
      %s25 = sadd.s32 1, %s21
    $region7: #{tpu_custom_call.1} parent=1 // loop_footer_branch
      %20 = sbr.rel target = $region3
    $region8: #{tpu_custom_call.1} parent=1 // loop_exit
      _
    %1035 = vsyncpa [#allocation3], 1
    %s1036 = scalar_lea.sflag [#allocation3], 1
    %1037 = vsyncpa %s1036, 1

</llo_original>
